<compile_context>
chip_gen: v7x
topology: tpu7x:2x2x1
jax: 0.10.0
libtpu: 0.0.40
codegen_flags: <defaults>
</compile_context>

<pallas_src>
import jax
import jax.numpy as jnp
from jax.experimental import pallas as pl
from jax.experimental.pallas import tpu as pltpu

_LANE = 128
_SUBLANE_F32 = 8


def _round_up(n: int, m: int) -> int:
    return ((n + m - 1) // m) * m


def _choose_tb(batch: int, block_batch: int) -> int:
    """Pick the batch tile: minimize ragged padding waste, prefer >=2 grid
    steps (so v7x's two TensorCores both get work), then the largest tile
    (amortizes the ~0.35us per-grid-step overhead)."""
    b8 = _round_up(batch, _SUBLANE_F32)
    cap = max(_SUBLANE_F32, min(_round_up(block_batch, _SUBLANE_F32), b8))
    best_tb, best_key = _SUBLANE_F32, None
    t = _SUBLANE_F32
    while t <= cap:
        steps = -(-b8 // t)
        waste = steps * t - batch
        key = (waste, 0 if steps >= 2 else 1, -t)
        if best_key is None or key < best_key:
            best_tb, best_key = t, key
        t += _SUBLANE_F32
    return best_tb


def _vmem_budget(tb, obs_pad, hid_dim, n_hidden, a_pad, n_actions):
    """(resident-parameter bytes, vmem_limit_bytes) from actual buffer sizes."""
    f32, bf16, i32 = 4, 2, 4
    sub = _SUBLANE_F32
    # Single-buffered resident parameters ((1, N) biases sublane-pad to (8, N)).
    params = (obs_pad * hid_dim * bf16
              + sub * hid_dim * f32
              + n_hidden * hid_dim * hid_dim * bf16
              + n_hidden * sub * hid_dim * f32
              + hid_dim * a_pad * bf16
              + sub * a_pad * f32)
    # Double-buffered streaming tiles (x in; Q / action out; lanes pad to 128).
    stream = 2 * (tb * obs_pad * f32
                  + tb * _round_up(n_actions, _LANE) * f32
                  + tb * _LANE * i32)
    # Live activation chain inside the body (f32 h, bf16 cast copy, padded Q).
    act = 2 * tb * hid_dim * (f32 + bf16) + 2 * tb * a_pad * f32
    total = params + stream + act
    # 25% + 2 MiB headroom, clamped to [32 MiB, 64 MiB] (safe on v5e/v6e/v7x).
    limit = max(32 << 20, min(int(total * 1.25) + (2 << 20), 64 << 20))
    return params, limit


def _make_dqn_kernel(n_actions: int):
    def kernel(x_ref, w_in_ref, b_in_ref, w_hid_ref, b_hid_ref,
               w_out_ref, b_out_ref, q_ref, act_ref):
        # Input layer + ReLU (bf16 operands, f32 MXU accumulation).
        h = jnp.dot(x_ref[...].astype(jnp.bfloat16), w_in_ref[...],
                    preferred_element_type=jnp.float32)
        h = jnp.maximum(h + b_in_ref[...], 0.0)

        # Hidden layers + ReLU (static unroll over the stacked weights).
        for i in range(w_hid_ref.shape[0]):
            h = jnp.dot(h.astype(jnp.bfloat16), w_hid_ref[i],
                        preferred_element_type=jnp.float32)
            h = jnp.maximum(h + b_hid_ref[i], 0.0)

        # Output layer (weights lane-padded to 128 cols for a dense MXU tile).
        q = jnp.dot(h.astype(jnp.bfloat16), w_out_ref[...],
                    preferred_element_type=jnp.float32) + b_out_ref[...]

        # Store only the real action columns (avoids the 16x-padded f32
        # writeback a 128-lane output slab would imply).
        q_ref[...] = q[:, :n_actions].astype(q_ref.dtype)

        # Fused greedy action = argmax over real actions (first max on ties,
        # matching jnp.argmax). Padded columns masked to -inf; the index
        # reduction is done in f32 (indices < 128 are exact) for robust
        # lane-reduction lowering.
        a_pad = q.shape[1]
        col = jax.lax.broadcasted_iota(jnp.int32, q.shape, 1)
        qm = jnp.where(col < n_actions, q, -jnp.inf)
        row_max = jnp.max(qm, axis=-1, keepdims=True)
        idx = jnp.where(qm >= row_max, col.astype(jnp.float32), float(a_pad))
        act_ref[...] = jnp.min(idx, axis=-1, keepdims=True).astype(jnp.int32)

    return kernel


def init_dqn_params(key, n_observations, n_actions, nb_hidden_layers=4, hid_dim=512):
    """PyTorch-style init: U(-1/sqrt(fan_in), 1/sqrt(fan_in)).

    Weights are stored pre-transposed as (in, out); biases as (1, out).
    """
    layer_dims = (
        [(n_observations, hid_dim)]
        + [(hid_dim, hid_dim)] * nb_hidden_layers
        + [(hid_dim, n_actions)]
    )
    params = []
    for fan_in, fan_out in layer_dims:
        key, kw, kb = jax.random.split(key, 3)
        bound = 1.0 / jnp.sqrt(jnp.float32(fan_in))
        w = jax.random.uniform(kw, (fan_in, fan_out), jnp.float32, -bound, bound)
        b = jax.random.uniform(kb, (1, fan_out), jnp.float32, -bound, bound)
        params.append((w, b))
    return params


def pack_dqn_params(params, n_actions):
    """Pack f32 (W, b) pairs into the kernel's layout.

    - input-layer rows (n_obs) lane-padded to a multiple of 128 (zeros),
    - hidden (H, H) weights stacked into (L, H, H) bf16, biases (L, 1, H) f32,
    - output layer lane-padded from n_actions to a multiple of 128.
    """
    assert len(params) >= 3, "need input, >=1 hidden, output layer"
    w_in, b_in = params[0]
    hidden = params[1:-1]
    w_out, b_out = params[-1]

    n_obs, hid_dim = w_in.shape
    obs_pad = _round_up(n_obs, _LANE)
    a_pad = _round_up(max(n_actions, 1), _LANE)

    w_in_p = jnp.zeros((obs_pad, hid_dim), jnp.bfloat16)
    w_in_p = w_in_p.at[:n_obs].set(w_in.astype(jnp.bfloat16))

    w_hid = jnp.stack([w for (w, _) in hidden]).astype(jnp.bfloat16)   # (L, H, H)
    b_hid = jnp.stack([b for (_, b) in hidden]).astype(jnp.float32)    # (L, 1, H)

    w_out_p = jnp.zeros((hid_dim, a_pad), jnp.bfloat16)
    w_out_p = w_out_p.at[:, :n_actions].set(w_out.astype(jnp.bfloat16))
    b_out_p = jnp.zeros((1, a_pad), jnp.float32)
    b_out_p = b_out_p.at[:, :n_actions].set(b_out.astype(jnp.float32))

    return dict(
        w_in=w_in_p, b_in=b_in.astype(jnp.float32),
        w_hid=w_hid, b_hid=b_hid,
        w_out=w_out_p, b_out=b_out_p,
        n_obs=n_obs, n_actions=n_actions,
    )


def dqn_forward(x, packed, *, block_batch=512):
    """x: (batch, n_observations) f32; packed: output of pack_dqn_params.

    Returns (q, actions):
      q       (batch, n_actions) f32  -- the module's forward output,
      actions (batch,)           i32  -- fused argmax(q, -1) (RL convenience).
    """
    batch, n_obs = x.shape
    assert n_obs == packed["n_obs"], (n_obs, packed["n_obs"])
    n_actions = packed["n_actions"]
    obs_pad, hid_dim = packed["w_in"].shape
    n_hidden = packed["w_hid"].shape[0]
    a_pad = packed["w_out"].shape[1]

    tb = _choose_tb(batch, block_batch)
    padded_batch = _round_up(batch, tb)
    grid = (padded_batch // tb,)

    params_bytes, vmem_limit = _vmem_budget(
        tb, obs_pad, hid_dim, n_hidden, a_pad, n_actions)
    if params_bytes > (48 << 20):
        # TODO(synk): stream hidden layers (second "arbitrary" grid axis or
        # pltpu.emit_pipeline) instead of keeping them all VMEM-resident.
        raise ValueError(
            f"resident parameters ({params_bytes >> 20} MiB) exceed the VMEM "
            "budget; layer streaming is not implemented yet")

    # Pad x: rows to the tiled batch, cols to the lane-padded obs dim.
    x = x.astype(jnp.float32)
    if padded_batch != batch or obs_pad != n_obs:
        x = jnp.pad(x, ((0, padded_batch - batch), (0, obs_pad - n_obs)))

    # Constant block index + single buffer => parameters resident in VMEM:
    # no re-DMA across grid steps and no wasted second buffer.
    def resident(shape):
        zeros = (0,) * len(shape)
        return pl.BlockSpec(shape, lambda i, z=zeros: z,
                            pipeline_mode=pl.Buffered(1))

    q_pad, act = pl.pallas_call(
        _make_dqn_kernel(n_actions),
        out_shape=(
            jax.ShapeDtypeStruct((padded_batch, n_actions), jnp.float32),
            jax.ShapeDtypeStruct((padded_batch, 1), jnp.int32),
        ),
        grid=grid,
        in_specs=[
            pl.BlockSpec((tb, obs_pad), lambda i: (i, 0)),     # x (batch-blocked)
            resident((obs_pad, hid_dim)),                      # w_in
            resident((1, hid_dim)),                            # b_in
            resident((n_hidden, hid_dim, hid_dim)),            # w_hid (stacked)
            resident((n_hidden, 1, hid_dim)),                  # b_hid (stacked)
            resident((hid_dim, a_pad)),                        # w_out (lane-padded)
            resident((1, a_pad)),                              # b_out (lane-padded)
        ],
        out_specs=(
            pl.BlockSpec((tb, n_actions), lambda i: (i, 0)),   # Q (real cols only)
            pl.BlockSpec((tb, 1), lambda i: (i, 0)),           # greedy action
        ),
        compiler_params=pltpu.CompilerParams(
            dimension_semantics=("parallel",),
            vmem_limit_bytes=vmem_limit),
    )(x, packed["w_in"], packed["b_in"], packed["w_hid"], packed["b_hid"],
      packed["w_out"], packed["b_out"])

    return q_pad[:batch], act[:batch, 0]


def dqn_reference_f32(x, params):
    """Pure-JAX, full-f32 reference mirroring the PyTorch forward."""
    h = x
    for i, (w, b) in enumerate(params):
        h = h @ w + b
        if i < len(params) - 1:
            h = jnp.maximum(h, 0.0)
    return h


def dqn_reference_bf16(x, packed):
    """Pure-JAX reference matching the kernel's bf16-operand / f32-accum numerics."""
    def dot(a, w):
        return jnp.dot(a.astype(jnp.bfloat16), w, preferred_element_type=jnp.float32)

    n_obs = packed["n_obs"]
    h = jnp.maximum(dot(x, packed["w_in"][:n_obs]) + packed["b_in"], 0.0)
    for i in range(packed["w_hid"].shape[0]):
        h = jnp.maximum(dot(h, packed["w_hid"][i]) + packed["b_hid"][i], 0.0)
    out = dot(h, packed["w_out"]) + packed["b_out"]
    return out[:, :packed["n_actions"]]


if __name__ == "__main__":
    # Small, module-consistent shapes.
    batch = 8
    n_observations = 32
    n_actions = 8
    nb_hidden_layers = 4
    hid_dim = 128

    key = jax.random.PRNGKey(0)
    key, kx = jax.random.split(key)
    x = jax.random.normal(kx, (batch, n_observations), jnp.float32)

    params = init_dqn_params(key, n_observations, n_actions,
                             nb_hidden_layers=nb_hidden_layers, hid_dim=hid_dim)
    packed = pack_dqn_params(params, n_actions)

    q, actions = dqn_forward(x, packed)
    q, actions = jax.block_until_ready((q, actions))
    assert q.shape == (batch, n_actions), q.shape
    assert actions.shape == (batch,), actions.shape

    # Fused argmax must agree exactly with argmax of the kernel's own Q output.
    assert bool(jnp.all(actions == jnp.argmax(q, axis=-1)))

    # bf16-operand / f32-accum reference (XLA bf16 dot rounding may differ
    # slightly from the Mosaic MXU path -> moderate tolerance).
    ref_bf16 = dqn_reference_bf16(x, packed)
    assert jnp.allclose(q, ref_bf16, atol=1e-2, rtol=1e-2), \
        float(jnp.max(jnp.abs(q - ref_bf16)))

    # Module-semantics (full f32) check — loose tolerance due to bf16 weights.
    ref_f32 = dqn_reference_f32(x, params)
    assert jnp.allclose(q, ref_f32, atol=5e-2, rtol=5e-2), \
        float(jnp.max(jnp.abs(q - ref_f32)))

    print("KERNEL_OK")
</pallas_src>

<mosaic_0001>
module attributes {stable_mosaic.version = 11 : i64} {
  func.func @kernel(%arg0: i32, %arg1: memref<8x128xf32, #tpu.memory_space<vmem>>, %arg2: memref<128x128xbf16, #tpu.memory_space<vmem>>, %arg3: memref<1x128xf32, #tpu.memory_space<vmem>>, %arg4: memref<4x128x128xbf16, #tpu.memory_space<vmem>>, %arg5: memref<4x1x128xf32, #tpu.memory_space<vmem>>, %arg6: memref<128x128xbf16, #tpu.memory_space<vmem>>, %arg7: memref<1x128xf32, #tpu.memory_space<vmem>>, %arg8: memref<8x8xf32, #tpu.memory_space<vmem>>, %arg9: memref<8x1xi32, #tpu.memory_space<vmem>>) attributes {dimension_semantics = [#tpu.dimension_semantics<parallel>], iteration_bounds = array<i64: 1>, scalar_prefetch = 0 : i64, scratch_operands = 0 : i64, tpu.core_type = #tpu.core_type<tc>, window_params = [{transform_indices = @transform_0, window_bounds = array<i64: 8, 128>}, {pipeline_mode = #tpu.pipeline_mode<synchronous>, transform_indices = @transform_1, window_bounds = array<i64: 128, 128>}, {pipeline_mode = #tpu.pipeline_mode<synchronous>, transform_indices = @transform_2, window_bounds = array<i64: 1, 128>}, {pipeline_mode = #tpu.pipeline_mode<synchronous>, transform_indices = @transform_3, window_bounds = array<i64: 4, 128, 128>}, {pipeline_mode = #tpu.pipeline_mode<synchronous>, transform_indices = @transform_4, window_bounds = array<i64: 4, 1, 128>}, {pipeline_mode = #tpu.pipeline_mode<synchronous>, transform_indices = @transform_5, window_bounds = array<i64: 128, 128>}, {pipeline_mode = #tpu.pipeline_mode<synchronous>, transform_indices = @transform_6, window_bounds = array<i64: 1, 128>}, {transform_indices = @transform_7, window_bounds = array<i64: 8, 8>}, {transform_indices = @transform_8, window_bounds = array<i64: 8, 1>}]} {
    %c0 = arith.constant 0 : index
    %c0_0 = arith.constant 0 : index
    %0 = vector.load %arg1[%c0, %c0_0] : memref<8x128xf32, #tpu.memory_space<vmem>>, vector<8x128xf32>
    %1 = arith.truncf %0 : vector<8x128xf32> to vector<8x128xbf16>
    %c0_1 = arith.constant 0 : index
    %c0_2 = arith.constant 0 : index
    %2 = vector.load %arg2[%c0_1, %c0_2] : memref<128x128xbf16, #tpu.memory_space<vmem>>, vector<128x128xbf16>
    %cst = arith.constant dense<0.000000e+00> : vector<8x128xf32>
    %3 = tpu.matmul %1, %2, %cst {dimension_numbers = #tpu.dot_dimension_numbers<[1], [0], [0], [1], [0, 0, 1, 1], [], []>} : vector<8x128xbf16>, vector<128x128xbf16>, vector<8x128xf32> -> vector<8x128xf32>
    %c0_3 = arith.constant 0 : index
    %c0_4 = arith.constant 0 : index
    %4 = vector.load %arg3[%c0_3, %c0_4] : memref<1x128xf32, #tpu.memory_space<vmem>>, vector<1x128xf32>
    %5 = vector.broadcast %4 : vector<1x128xf32> to vector<8x128xf32>
    %6 = arith.addf %3, %5 : vector<8x128xf32>
    %cst_5 = arith.constant 0.000000e+00 : f32
    %7 = vector.broadcast %cst_5 : f32 to vector<8x128xf32>
    %8 = arith.maximumf %6, %7 : vector<8x128xf32>
    %9 = arith.truncf %8 : vector<8x128xf32> to vector<8x128xbf16>
    %c0_6 = arith.constant 0 : index
    %c0_7 = arith.constant 0 : index
    %c0_8 = arith.constant 0 : index
    %10 = vector.load %arg4[%c0_6, %c0_7, %c0_8] : memref<4x128x128xbf16, #tpu.memory_space<vmem>>, vector<1x128x128xbf16>
    %11 = vector.shape_cast %10 : vector<1x128x128xbf16> to vector<128x128xbf16>
    %cst_9 = arith.constant dense<0.000000e+00> : vector<8x128xf32>
    %12 = tpu.matmul %9, %11, %cst_9 {dimension_numbers = #tpu.dot_dimension_numbers<[1], [0], [0], [1], [0, 0, 1, 1], [], []>} : vector<8x128xbf16>, vector<128x128xbf16>, vector<8x128xf32> -> vector<8x128xf32>
    %c0_10 = arith.constant 0 : index
    %c0_11 = arith.constant 0 : index
    %c0_12 = arith.constant 0 : index
    %13 = vector.load %arg5[%c0_10, %c0_11, %c0_12] : memref<4x1x128xf32, #tpu.memory_space<vmem>>, vector<1x1x128xf32>
    %14 = vector.shape_cast %13 : vector<1x1x128xf32> to vector<1x128xf32>
    %15 = vector.broadcast %14 : vector<1x128xf32> to vector<8x128xf32>
    %16 = arith.addf %12, %15 : vector<8x128xf32>
    %cst_13 = arith.constant 0.000000e+00 : f32
    %17 = vector.broadcast %cst_13 : f32 to vector<8x128xf32>
    %18 = arith.maximumf %16, %17 : vector<8x128xf32>
    %19 = arith.truncf %18 : vector<8x128xf32> to vector<8x128xbf16>
    %c1 = arith.constant 1 : index
    %c0_14 = arith.constant 0 : index
    %c0_15 = arith.constant 0 : index
    %20 = vector.load %arg4[%c1, %c0_14, %c0_15] : memref<4x128x128xbf16, #tpu.memory_space<vmem>>, vector<1x128x128xbf16>
    %21 = vector.shape_cast %20 : vector<1x128x128xbf16> to vector<128x128xbf16>
    %cst_16 = arith.constant dense<0.000000e+00> : vector<8x128xf32>
    %22 = tpu.matmul %19, %21, %cst_16 {dimension_numbers = #tpu.dot_dimension_numbers<[1], [0], [0], [1], [0, 0, 1, 1], [], []>} : vector<8x128xbf16>, vector<128x128xbf16>, vector<8x128xf32> -> vector<8x128xf32>
    %c1_17 = arith.constant 1 : index
    %c0_18 = arith.constant 0 : index
    %c0_19 = arith.constant 0 : index
    %23 = vector.load %arg5[%c1_17, %c0_18, %c0_19] : memref<4x1x128xf32, #tpu.memory_space<vmem>>, vector<1x1x128xf32>
    %24 = vector.shape_cast %23 : vector<1x1x128xf32> to vector<1x128xf32>
    %25 = vector.broadcast %24 : vector<1x128xf32> to vector<8x128xf32>
    %26 = arith.addf %22, %25 : vector<8x128xf32>
    %cst_20 = arith.constant 0.000000e+00 : f32
    %27 = vector.broadcast %cst_20 : f32 to vector<8x128xf32>
    %28 = arith.maximumf %26, %27 : vector<8x128xf32>
    %29 = arith.truncf %28 : vector<8x128xf32> to vector<8x128xbf16>
    %c2 = arith.constant 2 : index
    %c0_21 = arith.constant 0 : index
    %c0_22 = arith.constant 0 : index
    %30 = vector.load %arg4[%c2, %c0_21, %c0_22] : memref<4x128x128xbf16, #tpu.memory_space<vmem>>, vector<1x128x128xbf16>
    %31 = vector.shape_cast %30 : vector<1x128x128xbf16> to vector<128x128xbf16>
    %cst_23 = arith.constant dense<0.000000e+00> : vector<8x128xf32>
    %32 = tpu.matmul %29, %31, %cst_23 {dimension_numbers = #tpu.dot_dimension_numbers<[1], [0], [0], [1], [0, 0, 1, 1], [], []>} : vector<8x128xbf16>, vector<128x128xbf16>, vector<8x128xf32> -> vector<8x128xf32>
    %c2_24 = arith.constant 2 : index
    %c0_25 = arith.constant 0 : index
    %c0_26 = arith.constant 0 : index
    %33 = vector.load %arg5[%c2_24, %c0_25, %c0_26] : memref<4x1x128xf32, #tpu.memory_space<vmem>>, vector<1x1x128xf32>
    %34 = vector.shape_cast %33 : vector<1x1x128xf32> to vector<1x128xf32>
    %35 = vector.broadcast %34 : vector<1x128xf32> to vector<8x128xf32>
    %36 = arith.addf %32, %35 : vector<8x128xf32>
    %cst_27 = arith.constant 0.000000e+00 : f32
    %37 = vector.broadcast %cst_27 : f32 to vector<8x128xf32>
    %38 = arith.maximumf %36, %37 : vector<8x128xf32>
    %39 = arith.truncf %38 : vector<8x128xf32> to vector<8x128xbf16>
    %c3 = arith.constant 3 : index
    %c0_28 = arith.constant 0 : index
    %c0_29 = arith.constant 0 : index
    %40 = vector.load %arg4[%c3, %c0_28, %c0_29] : memref<4x128x128xbf16, #tpu.memory_space<vmem>>, vector<1x128x128xbf16>
    %41 = vector.shape_cast %40 : vector<1x128x128xbf16> to vector<128x128xbf16>
    %cst_30 = arith.constant dense<0.000000e+00> : vector<8x128xf32>
    %42 = tpu.matmul %39, %41, %cst_30 {dimension_numbers = #tpu.dot_dimension_numbers<[1], [0], [0], [1], [0, 0, 1, 1], [], []>} : vector<8x128xbf16>, vector<128x128xbf16>, vector<8x128xf32> -> vector<8x128xf32>
    %c3_31 = arith.constant 3 : index
    %c0_32 = arith.constant 0 : index
    %c0_33 = arith.constant 0 : index
    %43 = vector.load %arg5[%c3_31, %c0_32, %c0_33] : memref<4x1x128xf32, #tpu.memory_space<vmem>>, vector<1x1x128xf32>
    %44 = vector.shape_cast %43 : vector<1x1x128xf32> to vector<1x128xf32>
    %45 = vector.broadcast %44 : vector<1x128xf32> to vector<8x128xf32>
    %46 = arith.addf %42, %45 : vector<8x128xf32>
    %cst_34 = arith.constant 0.000000e+00 : f32
    %47 = vector.broadcast %cst_34 : f32 to vector<8x128xf32>
    %48 = arith.maximumf %46, %47 : vector<8x128xf32>
    %49 = arith.truncf %48 : vector<8x128xf32> to vector<8x128xbf16>
    %c0_35 = arith.constant 0 : index
    %c0_36 = arith.constant 0 : index
    %50 = vector.load %arg6[%c0_35, %c0_36] : memref<128x128xbf16, #tpu.memory_space<vmem>>, vector<128x128xbf16>
    %cst_37 = arith.constant dense<0.000000e+00> : vector<8x128xf32>
    %51 = tpu.matmul %49, %50, %cst_37 {dimension_numbers = #tpu.dot_dimension_numbers<[1], [0], [0], [1], [0, 0, 1, 1], [], []>} : vector<8x128xbf16>, vector<128x128xbf16>, vector<8x128xf32> -> vector<8x128xf32>
    %c0_38 = arith.constant 0 : index
    %c0_39 = arith.constant 0 : index
    %52 = vector.load %arg7[%c0_38, %c0_39] : memref<1x128xf32, #tpu.memory_space<vmem>>, vector<1x128xf32>
    %53 = vector.broadcast %52 : vector<1x128xf32> to vector<8x128xf32>
    %54 = arith.addf %51, %53 : vector<8x128xf32>
    %55 = vector.extract_strided_slice %54 {offsets = [0, 0], sizes = [8, 8], strides = [1, 1]} : vector<8x128xf32> to vector<8x8xf32>
    %c0_40 = arith.constant 0 : index
    %c0_41 = arith.constant 0 : index
    %56 = vector.load %arg8[%c0_40, %c0_41] : memref<8x8xf32, #tpu.memory_space<vmem>>, vector<8x8xf32>
    tpu.vector_store %arg8[%c0_40, %c0_41], %55 {strides = array<i32>} : memref<8x8xf32, #tpu.memory_space<vmem>>, vector<8x8xf32>,
    %57 = tpu.iota {dimensions = array<i32: 1>} : vector<8x128xi32>
    %c8_i32 = arith.constant 8 : i32
    %58 = vector.broadcast %c8_i32 : i32 to vector<8x128xi32>
    %59 = arith.cmpi slt, %57, %58 : vector<8x128xi32>
    %cst_42 = arith.constant 0xFF800000 : f32
    %60 = vector.broadcast %cst_42 : f32 to vector<8x128xf32>
    %61 = arith.select %59, %54, %60 : vector<8x128xi1>, vector<8x128xf32>
    %cst_43 = arith.constant dense<0xFF800000> : vector<8xf32>
    %62 = vector.multi_reduction <maximumf>, %61, %cst_43 [1] : vector<8x128xf32> to vector<8xf32>
    %63 = vector.shape_cast %62 : vector<8xf32> to vector<8x1xf32>
    %64 = vector.broadcast %63 : vector<8x1xf32> to vector<8x128xf32>
    %65 = arith.cmpf oge, %61, %64 : vector<8x128xf32>
    %66 = arith.sitofp %57 : vector<8x128xi32> to vector<8x128xf32>
    %cst_44 = arith.constant 1.280000e+02 : f32
    %67 = vector.broadcast %cst_44 : f32 to vector<8x128xf32>
    %68 = arith.select %65, %66, %67 : vector<8x128xi1>, vector<8x128xf32>
    %cst_45 = arith.constant dense<0x7F800000> : vector<8xf32>
    %69 = vector.multi_reduction <minimumf>, %68, %cst_45 [1] : vector<8x128xf32> to vector<8xf32>
    %70 = vector.shape_cast %69 : vector<8xf32> to vector<8x1xf32>
    %71 = arith.fptosi %70 : vector<8x1xf32> to vector<8x1xi32>
    %c0_46 = arith.constant 0 : index
    %c0_47 = arith.constant 0 : index
    %72 = vector.load %arg9[%c0_46, %c0_47] : memref<8x1xi32, #tpu.memory_space<vmem>>, vector<8x1xi32>
    tpu.vector_store %arg9[%c0_46, %c0_47], %71 {strides = array<i32>} : memref<8x1xi32, #tpu.memory_space<vmem>>, vector<8x1xi32>,
    return
  }
  func.func @transform_0(%arg0: i32) -> (i32, i32) {
    %c0_i32 = arith.constant 0 : i32
    %c0_i32_0 = arith.constant 0 : i32
    return %arg0, %c0_i32 : i32, i32
  }
  func.func @transform_1(%arg0: i32) -> (i32, i32) {
    %c0_i32 = arith.constant 0 : i32
    %c0_i32_0 = arith.constant 0 : i32
    %c0_i32_1 = arith.constant 0 : i32
    return %c0_i32, %c0_i32_0 : i32, i32
  }
  func.func @transform_2(%arg0: i32) -> (i32, i32) {
    %c0_i32 = arith.constant 0 : i32
    %c0_i32_0 = arith.constant 0 : i32
    %c0_i32_1 = arith.constant 0 : i32
    return %c0_i32, %c0_i32_0 : i32, i32
  }
  func.func @transform_3(%arg0: i32) -> (i32, i32, i32) {
    %c0_i32 = arith.constant 0 : i32
    %c0_i32_0 = arith.constant 0 : i32
    %c0_i32_1 = arith.constant 0 : i32
    %c0_i32_2 = arith.constant 0 : i32
    return %c0_i32, %c0_i32_0, %c0_i32_1 : i32, i32, i32
  }
  func.func @transform_4(%arg0: i32) -> (i32, i32, i32) {
    %c0_i32 = arith.constant 0 : i32
    %c0_i32_0 = arith.constant 0 : i32
    %c0_i32_1 = arith.constant 0 : i32
    %c0_i32_2 = arith.constant 0 : i32
    return %c0_i32, %c0_i32_0, %c0_i32_1 : i32, i32, i32
  }
  func.func @transform_5(%arg0: i32) -> (i32, i32) {
    %c0_i32 = arith.constant 0 : i32
    %c0_i32_0 = arith.constant 0 : i32
    %c0_i32_1 = arith.constant 0 : i32
    return %c0_i32, %c0_i32_0 : i32, i32
  }
  func.func @transform_6(%arg0: i32) -> (i32, i32) {
    %c0_i32 = arith.constant 0 : i32
    %c0_i32_0 = arith.constant 0 : i32
    %c0_i32_1 = arith.constant 0 : i32
    return %c0_i32, %c0_i32_0 : i32, i32
  }
  func.func @transform_7(%arg0: i32) -> (i32, i32) {
    %c0_i32 = arith.constant 0 : i32
    %c0_i32_0 = arith.constant 0 : i32
    return %arg0, %c0_i32 : i32, i32
  }
  func.func @transform_8(%arg0: i32) -> (i32, i32) {
    %c0_i32 = arith.constant 0 : i32
    %c0_i32_0 = arith.constant 0 : i32
    return %arg0, %c0_i32 : i32, i32
  }
}

</mosaic_0001>

<llo_original>
// kernel: tpu_custom_call.1
$region0: #{tpu_custom_call.1}
  #allocation0 [shape = 'u32[]', space=smem, size = 0x4, offset = 0x4, fixed_abs, tag = 'smem constant byte address 0x4 - core index']
  #allocation1 [shape = 'u32[144,128]{1,0:T(1,128)}', space=vmem, size = 0x12000, scoped, tag = 'internal scratch']
  %s0 = inlined_call_operand.hbm [shape: f32[8,128], index: 0, kind: input, shape index: {}]
  %s1 = inlined_call_operand.hbm [shape: bf16[128,128], index: 1, kind: input, shape index: {}]
  %s2 = inlined_call_operand.vmem [shape: f32[1,128], index: 2, kind: input, shape index: {}]
  %s3 = inlined_call_operand.hbm [shape: bf16[4,128,128], index: 3, kind: input, shape index: {}]
  %s4 = inlined_call_operand.vmem [shape: f32[4,1,128], index: 4, kind: input, shape index: {}]
  %s5 = inlined_call_operand.hbm [shape: bf16[128,128], index: 5, kind: input, shape index: {}]
  %s6 = inlined_call_operand.vmem [shape: f32[1,128], index: 6, kind: input, shape index: {}]
  %s7 = inlined_call_operand.hbm [shape: f32[8,8], index: 7, kind: output, shape index: {0}]
  %s8 = inlined_call_operand.vmem [shape: s32[8,1], index: 8, kind: output, shape index: {1}]
  %9 = xla_tuple %s7, %s8
  %s10 = sld [smem:[#allocation0]]
  $region62: #{tpu_custom_call.1} parent=0
    _
  %s12 = ssub.s32 1, %s10
  %s13 = scalar_select 0, %s12, %s10
  $region1: #{tpu_custom_call.1} parent=0
    #allocation2 [shape = 'u8[4096]{0}', space=vmem, size = 0x1000, scoped, tag = 'input window, operand 0, single buffered']
    #allocation3 [shape = 's32[1]{0}', space=sflag, size = 0x4, scoped, tag = 'scoped memory for tpu_custom_call.1']
    #allocation4 [shape = 's32[1]{0}', space=sflag, size = 0x4, scoped, tag = 'scoped memory for tpu_custom_call.1']
    #allocation5 [shape = 'u8[32768]{0}', space=vmem, size = 0x8000, scoped, tag = 'input window, operand 1, single buffered']
    #allocation6 [shape = 's32[1]{0}', space=sflag, size = 0x4, scoped, tag = 'scoped memory for tpu_custom_call.1']
    #allocation7 [shape = 'u8[131072]{0}', space=vmem, size = 0x20000, scoped, tag = 'input window, operand 3, single buffered']
    #allocation8 [shape = 'u8[32768]{0}', space=vmem, size = 0x8000, scoped, tag = 'input window, operand 5, single buffered']
    #allocation9 [shape = 's32[1]{0}', space=sflag, size = 0x4, scoped, tag = 'scoped memory for tpu_custom_call.1']
    #allocation10 [shape = 'u8[4096]{0}', space=vmem, size = 0x1000, scoped, tag = 'output window, operand 0, single buffered']
    %14 = vsyncpa [#allocation3], 0
    %15 = vsyncpa [#allocation6], 0
    %16 = vsyncpa [#allocation9], 0
    %17 = vsyncpa [#allocation4], 0
    // Predicated region
    $region2: #{tpu_custom_call.1} parent=1 // pred_check
      _
    $region3: #{tpu_custom_call.1} parent=1 // pred_check_branch
      %19 = sbr.rel (0) target = $region5
    $region4: #{tpu_custom_call.1} parent=1 // pred_region
      %s21 = ssub.s32 128, 128
      %22 = vsyncadd [#allocation3], %s21
      %s24 = sshll.u32 [#allocation2], 4
      %s25 = int_to_ptr.vmem [resolvable:$true] %s24
      %27 = dma.hbm_to_vmem [thread:$0]  %s0, 128, %s25, [#allocation3]
    $region5: #{tpu_custom_call.1} parent=1 // pred_fallthru
      _
    // Predicated region
    $region6: #{tpu_custom_call.1} parent=1 // pred_check
      _
    $region7: #{tpu_custom_call.1} parent=1 // pred_check_branch
      %29 = sbr.rel (0) target = $region9
    $region8: #{tpu_custom_call.1} parent=1 // pred_region
      %s31 = ssub.s32 1024, 1024
      %32 = vsyncadd [#allocation6], %s31
      %s33 = sshll.u32 [#allocation5], 4
      %s34 = int_to_ptr.vmem [resolvable:$true] %s33
      %39 = dma.hbm_to_vmem [thread:$0]  %s1, 1024, %s34, [#allocation6], 64, 64, 4
    $region9: #{tpu_custom_call.1} parent=1 // pred_fallthru
      _
    // Predicated region
    $region10: #{tpu_custom_call.1} parent=1 // pred_check
      _
    $region11: #{tpu_custom_call.1} parent=1 // pred_check_branch
      %41 = sbr.rel (0) target = $region13
    $region12: #{tpu_custom_call.1} parent=1 // pred_region
      _
    $region13: #{tpu_custom_call.1} parent=1 // pred_fallthru
      _
    // Predicated region
    $region14: #{tpu_custom_call.1} parent=1 // pred_check
      _
    $region15: #{tpu_custom_call.1} parent=1 // pred_check_branch
      %43 = sbr.rel (0) target = $region17
    $region16: #{tpu_custom_call.1} parent=1 // pred_region
      %s45 = ssub.s32 4096, 4096
      %46 = vsyncadd [#allocation6], %s45
      %s47 = sshll.u32 [#allocation7], 4
      %s48 = int_to_ptr.vmem [resolvable:$true] %s47
      %53 = dma.hbm_to_vmem [thread:$0]  %s3, 4096, %s48, [#allocation6], 64, 64, 4
    $region17: #{tpu_custom_call.1} parent=1 // pred_fallthru
      _
    // Predicated region
    $region18: #{tpu_custom_call.1} parent=1 // pred_check
      _
    $region19: #{tpu_custom_call.1} parent=1 // pred_check_branch
      %55 = sbr.rel (0) target = $region21
    $region20: #{tpu_custom_call.1} parent=1 // pred_region
      _
    $region21: #{tpu_custom_call.1} parent=1 // pred_fallthru
      _
    // Predicated region
    $region22: #{tpu_custom_call.1} parent=1 // pred_check
      _
    $region23: #{tpu_custom_call.1} parent=1 // pred_check_branch
      %57 = sbr.rel (0) target = $region25
    $region24: #{tpu_custom_call.1} parent=1 // pred_region
      %s59 = ssub.s32 1024, 1024
      %60 = vsyncadd [#allocation9], %s59
      %s61 = sshll.u32 [#allocation8], 4
      %s62 = int_to_ptr.vmem [resolvable:$true] %s61
      %67 = dma.hbm_to_vmem [thread:$0]  %s5, 1024, %s62, [#allocation9], 64, 64, 4
    $region25: #{tpu_custom_call.1} parent=1 // pred_fallthru
      _
    // Predicated region
    $region26: #{tpu_custom_call.1} parent=1 // pred_check
      _
    $region27: #{tpu_custom_call.1} parent=1 // pred_check_branch
      %69 = sbr.rel (0) target = $region29
    $region28: #{tpu_custom_call.1} parent=1 // pred_region
      _
    $region29: #{tpu_custom_call.1} parent=1 // pred_fallthru
      _
    // Predicated region
    $region30: #{tpu_custom_call.1} parent=1 // pred_check
      _
    $region31: #{tpu_custom_call.1} parent=1 // pred_check_branch
      %71 = sbr.rel (0) target = $region33
    $region32: #{tpu_custom_call.1} parent=1 // pred_region
      %72 = dma.done [#allocation3], 128
    $region33: #{tpu_custom_call.1} parent=1 // pred_fallthru
      _
    // Predicated region
    $region34: #{tpu_custom_call.1} parent=1 // pred_check
      _
    $region35: #{tpu_custom_call.1} parent=1 // pred_check_branch
      %74 = sbr.rel (0) target = $region37
    $region36: #{tpu_custom_call.1} parent=1 // pred_region
      %75 = dma.done [#allocation6], 1024
    $region37: #{tpu_custom_call.1} parent=1 // pred_fallthru
      _
    // Predicated region
    $region38: #{tpu_custom_call.1} parent=1 // pred_check
      _
    $region39: #{tpu_custom_call.1} parent=1 // pred_check_branch
      %77 = sbr.rel (0) target = $region41
    $region40: #{tpu_custom_call.1} parent=1 // pred_region
      %78 = dma.done [#allocation6], 4096
    $region41: #{tpu_custom_call.1} parent=1 // pred_fallthru
      _
    // Predicated region
    $region42: #{tpu_custom_call.1} parent=1 // pred_check
      _
    $region43: #{tpu_custom_call.1} parent=1 // pred_check_branch
      %80 = sbr.rel (0) target = $region45
    $region44: #{tpu_custom_call.1} parent=1 // pred_region
      %81 = dma.done [#allocation9], 1024
    $region45: #{tpu_custom_call.1} parent=1 // pred_fallthru
      _
    %v83 = vld [vmem:[#allocation2] sm:$0xff]
    %v84 = vpack.c.bf16 %v83, %v83
    %v85 = vld [vmem:[#allocation5] sm:$0xf]
    %v86 = vld [vmem:[#allocation5 + $0x4] sm:$0xf]
    %v87 = vld [vmem:[#allocation5 + $0x8] sm:$0xf]
    %v88 = vld [vmem:[#allocation5 + $0xc] sm:$0xf]
    %v89 = vld [vmem:[#allocation5 + $0x10] sm:$0xf]
    %v90 = vld [vmem:[#allocation5 + $0x14] sm:$0xf]
    %v91 = vld [vmem:[#allocation5 + $0x18] sm:$0xf]
    %v92 = vld [vmem:[#allocation5 + $0x1c] sm:$0xf]
    %v93 = vld [vmem:[#allocation5 + $0x20] sm:$0xf]
    %v94 = vld [vmem:[#allocation5 + $0x24] sm:$0xf]
    %v95 = vld [vmem:[#allocation5 + $0x28] sm:$0xf]
    %v96 = vld [vmem:[#allocation5 + $0x2c] sm:$0xf]
    %v97 = vld [vmem:[#allocation5 + $0x30] sm:$0xf]
    %v98 = vld [vmem:[#allocation5 + $0x34] sm:$0xf]
    %v99 = vld [vmem:[#allocation5 + $0x38] sm:$0xf]
    %v100 = vld [vmem:[#allocation5 + $0x3c] sm:$0xf]
    %v101 = vld [vmem:[%s2] sm:$0x1]
    %v103 = vlaneseq
    %v104 = vshrl.u32 %v103, 7
    %v105 = vsub.s32 0, %v104
    %v106 = vrot.slane %v101, %v105
    %v124 = vunpack.c.l.b16 %v85
    %v125 = vunpack.c.l.b16 %v86
    %v126 = vunpack.c.l.b16 %v87
    %v127 = vunpack.c.l.b16 %v88
    %v128 = vunpack.c.l.b16 %v89
    %v129 = vunpack.c.l.b16 %v90
    %v130 = vunpack.c.l.b16 %v91
    %v131 = vunpack.c.l.b16 %v92
    %v132 = vunpack.c.l.b16 %v93
    %v133 = vunpack.c.l.b16 %v94
    %v134 = vunpack.c.l.b16 %v95
    %v135 = vunpack.c.l.b16 %v96
    %v136 = vunpack.c.l.b16 %v97
    %v137 = vunpack.c.l.b16 %v98
    %v138 = vunpack.c.l.b16 %v99
    %v139 = vunpack.c.l.b16 %v100
    %v140 = vpack.c.b16 %v125, %v124
    %v141 = vpack.c.b16 %v127, %v126
    %v142 = vpack.c.b16 %v129, %v128
    %v143 = vpack.c.b16 %v131, %v130
    %v144 = vpack.c.b16 %v133, %v132
    %v145 = vpack.c.b16 %v135, %v134
    %v146 = vpack.c.b16 %v137, %v136
    %v147 = vpack.c.b16 %v139, %v138
    %156 = vmatprep.subr.bf16.mxu0 0
    %157 = vmatpush1.bf16.msra.mxu0 %v140
    %158 = vmatprep.subr.bf16.mxu0 0
    %159 = vmatpush1.bf16.msra.mxu0 %v141
    %160 = vmatprep.subr.bf16.mxu0 0
    %161 = vmatpush1.bf16.msra.mxu0 %v142
    %162 = vmatprep.subr.bf16.mxu0 0
    %163 = vmatpush1.bf16.msra.mxu0 %v143
    %164 = vmatprep.subr.bf16.mxu0 0
    %165 = vmatpush1.bf16.msra.mxu0 %v144
    %166 = vmatprep.subr.bf16.mxu0 0
    %167 = vmatpush1.bf16.msra.mxu0 %v145
    %168 = vmatprep.subr.bf16.mxu0 0
    %169 = vmatpush1.bf16.msra.mxu0 %v146
    %170 = vmatprep.subr.bf16.mxu0 0
    %171 = vmatpush1.bf16.msra.mxu0 %v147
    %172 = vmatprep.subr.bf16.mxu0 0
    %173 = vmatpush1.bf16.msra.mxu0 0
    %174 = vmatprep.subr.bf16.mxu0 0
    %175 = vmatpush1.bf16.msra.mxu0 0
    %176 = vmatprep.subr.bf16.mxu0 0
    %177 = vmatpush1.bf16.msra.mxu0 0
    %178 = vmatprep.subr.bf16.mxu0 0
    %179 = vmatpush1.bf16.msra.mxu0 0
    %180 = vmatprep.subr.bf16.mxu0 0
    %181 = vmatpush1.bf16.msra.mxu0 0
    %182 = vmatprep.subr.bf16.mxu0 0
    %183 = vmatpush1.bf16.msra.mxu0 0
    %184 = vmatprep.subr.bf16.mxu0 0
    %185 = vmatpush1.bf16.msra.mxu0 0
    %186 = vmatprep.subr.bf16.mxu0 0
    %187 = vmatpush1.bf16.msra.mxu0 0
    %188 = vmatprep.mubr.bf16.mxu0 0
    %189 = vmatmul.mubr.bf16.gmra.mrb[0].mxu0 %v84
    %v190 = vpop.f32.mrb[0].mxu0
    %v191 = vadd.f32 %v106, %v190
    %v192 = vpop.f32.mrb[0].mxu0
    %v193 = vpop.f32.mrb[0].mxu0
    %v194 = vpop.f32.mrb[0].mxu0
    %195 = vdwg.mxu0
    %v196 = vmax.f32 %v191, 0.0
    %v197 = vpack.c.bf16 %v196, %v196
    %v198 = vld [vmem:[#allocation7] sm:$0xf]
    %v199 = vld [vmem:[#allocation7 + $0x4] sm:$0xf]
    %v200 = vld [vmem:[#allocation7 + $0x8] sm:$0xf]
    %v201 = vld [vmem:[#allocation7 + $0xc] sm:$0xf]
    %v202 = vld [vmem:[#allocation7 + $0x10] sm:$0xf]
    %v203 = vld [vmem:[#allocation7 + $0x14] sm:$0xf]
    %v204 = vld [vmem:[#allocation7 + $0x18] sm:$0xf]
    %v205 = vld [vmem:[#allocation7 + $0x1c] sm:$0xf]
    %v206 = vld [vmem:[#allocation7 + $0x20] sm:$0xf]
    %v207 = vld [vmem:[#allocation7 + $0x24] sm:$0xf]
    %v208 = vld [vmem:[#allocation7 + $0x28] sm:$0xf]
    %v209 = vld [vmem:[#allocation7 + $0x2c] sm:$0xf]
    %v210 = vld [vmem:[#allocation7 + $0x30] sm:$0xf]
    %v211 = vld [vmem:[#allocation7 + $0x34] sm:$0xf]
    %v212 = vld [vmem:[#allocation7 + $0x38] sm:$0xf]
    %v213 = vld [vmem:[#allocation7 + $0x3c] sm:$0xf]
    %v214 = vld [vmem:[%s4] sm:$0x1]
    %v216 = vlaneseq
    %v217 = vshrl.u32 %v216, 7
    %v218 = vsub.s32 0, %v217
    %v219 = vrot.slane %v214, %v218
    %v237 = vunpack.c.l.b16 %v198
    %v238 = vunpack.c.l.b16 %v199
    %v239 = vunpack.c.l.b16 %v200
    %v240 = vunpack.c.l.b16 %v201
    %v241 = vunpack.c.l.b16 %v202
    %v242 = vunpack.c.l.b16 %v203
    %v243 = vunpack.c.l.b16 %v204
    %v244 = vunpack.c.l.b16 %v205
    %v245 = vunpack.c.l.b16 %v206
    %v246 = vunpack.c.l.b16 %v207
    %v247 = vunpack.c.l.b16 %v208
    %v248 = vunpack.c.l.b16 %v209
    %v249 = vunpack.c.l.b16 %v210
    %v250 = vunpack.c.l.b16 %v211
    %v251 = vunpack.c.l.b16 %v212
    %v252 = vunpack.c.l.b16 %v213
    %v253 = vpack.c.b16 %v238, %v237
    %v254 = vpack.c.b16 %v240, %v239
    %v255 = vpack.c.b16 %v242, %v241
    %v256 = vpack.c.b16 %v244, %v243
    %v257 = vpack.c.b16 %v246, %v245
    %v258 = vpack.c.b16 %v248, %v247
    %v259 = vpack.c.b16 %v250, %v249
    %v260 = vpack.c.b16 %v252, %v251
    %269 = vmatprep.subr.bf16.mxu0 0
    %270 = vmatpush1.bf16.msra.mxu0 %v253
    %271 = vmatprep.subr.bf16.mxu0 0
    %272 = vmatpush1.bf16.msra.mxu0 %v254
    %273 = vmatprep.subr.bf16.mxu0 0
    %274 = vmatpush1.bf16.msra.mxu0 %v255
    %275 = vmatprep.subr.bf16.mxu0 0
    %276 = vmatpush1.bf16.msra.mxu0 %v256
    %277 = vmatprep.subr.bf16.mxu0 0
    %278 = vmatpush1.bf16.msra.mxu0 %v257
    %279 = vmatprep.subr.bf16.mxu0 0
    %280 = vmatpush1.bf16.msra.mxu0 %v258
    %281 = vmatprep.subr.bf16.mxu0 0
    %282 = vmatpush1.bf16.msra.mxu0 %v259
    %283 = vmatprep.subr.bf16.mxu0 0
    %284 = vmatpush1.bf16.msra.mxu0 %v260
    %285 = vmatprep.subr.bf16.mxu0 0
    %286 = vmatpush1.bf16.msra.mxu0 0
    %287 = vmatprep.subr.bf16.mxu0 0
    %288 = vmatpush1.bf16.msra.mxu0 0
    %289 = vmatprep.subr.bf16.mxu0 0
    %290 = vmatpush1.bf16.msra.mxu0 0
    %291 = vmatprep.subr.bf16.mxu0 0
    %292 = vmatpush1.bf16.msra.mxu0 0
    %293 = vmatprep.subr.bf16.mxu0 0
    %294 = vmatpush1.bf16.msra.mxu0 0
    %295 = vmatprep.subr.bf16.mxu0 0
    %296 = vmatpush1.bf16.msra.mxu0 0
    %297 = vmatprep.subr.bf16.mxu0 0
    %298 = vmatpush1.bf16.msra.mxu0 0
    %299 = vmatprep.subr.bf16.mxu0 0
    %300 = vmatpush1.bf16.msra.mxu0 0
    %301 = vmatprep.mubr.bf16.mxu0 0
    %302 = vmatmul.mubr.bf16.gmra.mrb[0].mxu0 %v197
    %v303 = vpop.f32.mrb[0].mxu0
    %v304 = vadd.f32 %v219, %v303
    %v305 = vpop.f32.mrb[0].mxu0
    %v306 = vpop.f32.mrb[0].mxu0
    %v307 = vpop.f32.mrb[0].mxu0
    %308 = vdwg.mxu0
    %v309 = vmax.f32 %v304, 0.0
    %v310 = vpack.c.bf16 %v309, %v309
    %s311 = scalar_lea.vmem [#allocation7], 64
    %v312 = vld [vmem:[%s311] sm:$0xf]
    %v313 = vld [vmem:[%s311 + $0x4] sm:$0xf]
    %v314 = vld [vmem:[%s311 + $0x8] sm:$0xf]
    %v315 = vld [vmem:[%s311 + $0xc] sm:$0xf]
    %v316 = vld [vmem:[%s311 + $0x10] sm:$0xf]
    %v317 = vld [vmem:[%s311 + $0x14] sm:$0xf]
    %v318 = vld [vmem:[%s311 + $0x18] sm:$0xf]
    %v319 = vld [vmem:[%s311 + $0x1c] sm:$0xf]
    %v320 = vld [vmem:[%s311 + $0x20] sm:$0xf]
    %v321 = vld [vmem:[%s311 + $0x24] sm:$0xf]
    %v322 = vld [vmem:[%s311 + $0x28] sm:$0xf]
    %v323 = vld [vmem:[%s311 + $0x2c] sm:$0xf]
    %v324 = vld [vmem:[%s311 + $0x30] sm:$0xf]
    %v325 = vld [vmem:[%s311 + $0x34] sm:$0xf]
    %v326 = vld [vmem:[%s311 + $0x38] sm:$0xf]
    %v327 = vld [vmem:[%s311 + $0x3c] sm:$0xf]
    %s328 = scalar_lea.vmem %s4, 1
    %v329 = vld [vmem:[%s328] sm:$0x1]
    %v331 = vlaneseq
    %v332 = vshrl.u32 %v331, 7
    %v333 = vsub.s32 0, %v332
    %v334 = vrot.slane %v329, %v333
    %v352 = vunpack.c.l.b16 %v312
    %v353 = vunpack.c.l.b16 %v313
    %v354 = vunpack.c.l.b16 %v314
    %v355 = vunpack.c.l.b16 %v315
    %v356 = vunpack.c.l.b16 %v316
    %v357 = vunpack.c.l.b16 %v317
    %v358 = vunpack.c.l.b16 %v318
    %v359 = vunpack.c.l.b16 %v319
    %v360 = vunpack.c.l.b16 %v320
    %v361 = vunpack.c.l.b16 %v321
    %v362 = vunpack.c.l.b16 %v322
    %v363 = vunpack.c.l.b16 %v323
    %v364 = vunpack.c.l.b16 %v324
    %v365 = vunpack.c.l.b16 %v325
    %v366 = vunpack.c.l.b16 %v326
    %v367 = vunpack.c.l.b16 %v327
    %v368 = vpack.c.b16 %v353, %v352
    %v369 = vpack.c.b16 %v355, %v354
    %v370 = vpack.c.b16 %v357, %v356
    %v371 = vpack.c.b16 %v359, %v358
    %v372 = vpack.c.b16 %v361, %v360
    %v373 = vpack.c.b16 %v363, %v362
    %v374 = vpack.c.b16 %v365, %v364
    %v375 = vpack.c.b16 %v367, %v366
    %384 = vmatprep.subr.bf16.mxu0 0
    %385 = vmatpush1.bf16.msra.mxu0 %v368
    %386 = vmatprep.subr.bf16.mxu0 0
    %387 = vmatpush1.bf16.msra.mxu0 %v369
    %388 = vmatprep.subr.bf16.mxu0 0
    %389 = vmatpush1.bf16.msra.mxu0 %v370
    %390 = vmatprep.subr.bf16.mxu0 0
    %391 = vmatpush1.bf16.msra.mxu0 %v371
    %392 = vmatprep.subr.bf16.mxu0 0
    %393 = vmatpush1.bf16.msra.mxu0 %v372
    %394 = vmatprep.subr.bf16.mxu0 0
    %395 = vmatpush1.bf16.msra.mxu0 %v373
    %396 = vmatprep.subr.bf16.mxu0 0
    %397 = vmatpush1.bf16.msra.mxu0 %v374
    %398 = vmatprep.subr.bf16.mxu0 0
    %399 = vmatpush1.bf16.msra.mxu0 %v375
    %400 = vmatprep.subr.bf16.mxu0 0
    %401 = vmatpush1.bf16.msra.mxu0 0
    %402 = vmatprep.subr.bf16.mxu0 0
    %403 = vmatpush1.bf16.msra.mxu0 0
    %404 = vmatprep.subr.bf16.mxu0 0
    %405 = vmatpush1.bf16.msra.mxu0 0
    %406 = vmatprep.subr.bf16.mxu0 0
    %407 = vmatpush1.bf16.msra.mxu0 0
    %408 = vmatprep.subr.bf16.mxu0 0
    %409 = vmatpush1.bf16.msra.mxu0 0
    %410 = vmatprep.subr.bf16.mxu0 0
    %411 = vmatpush1.bf16.msra.mxu0 0
    %412 = vmatprep.subr.bf16.mxu0 0
    %413 = vmatpush1.bf16.msra.mxu0 0
    %414 = vmatprep.subr.bf16.mxu0 0
    %415 = vmatpush1.bf16.msra.mxu0 0
    %416 = vmatprep.mubr.bf16.mxu0 0
    %417 = vmatmul.mubr.bf16.gmra.mrb[0].mxu0 %v310
    %v418 = vpop.f32.mrb[0].mxu0
    %v419 = vadd.f32 %v334, %v418
    %v420 = vpop.f32.mrb[0].mxu0
    %v421 = vpop.f32.mrb[0].mxu0
    %v422 = vpop.f32.mrb[0].mxu0
    %423 = vdwg.mxu0
    %v424 = vmax.f32 %v419, 0.0
    %v425 = vpack.c.bf16 %v424, %v424
    %s426 = scalar_lea.vmem [#allocation7], 128
    %v427 = vld [vmem:[%s426] sm:$0xf]
    %v428 = vld [vmem:[%s426 + $0x4] sm:$0xf]
    %v429 = vld [vmem:[%s426 + $0x8] sm:$0xf]
    %v430 = vld [vmem:[%s426 + $0xc] sm:$0xf]
    %v431 = vld [vmem:[%s426 + $0x10] sm:$0xf]
    %v432 = vld [vmem:[%s426 + $0x14] sm:$0xf]
    %v433 = vld [vmem:[%s426 + $0x18] sm:$0xf]
    %v434 = vld [vmem:[%s426 + $0x1c] sm:$0xf]
    %v435 = vld [vmem:[%s426 + $0x20] sm:$0xf]
    %v436 = vld [vmem:[%s426 + $0x24] sm:$0xf]
    %v437 = vld [vmem:[%s426 + $0x28] sm:$0xf]
    %v438 = vld [vmem:[%s426 + $0x2c] sm:$0xf]
    %v439 = vld [vmem:[%s426 + $0x30] sm:$0xf]
    %v440 = vld [vmem:[%s426 + $0x34] sm:$0xf]
    %v441 = vld [vmem:[%s426 + $0x38] sm:$0xf]
    %v442 = vld [vmem:[%s426 + $0x3c] sm:$0xf]
    %s443 = scalar_lea.vmem %s4, 2
    %v444 = vld [vmem:[%s443] sm:$0x1]
    %v446 = vlaneseq
    %v447 = vshrl.u32 %v446, 7
    %v448 = vsub.s32 0, %v447
    %v449 = vrot.slane %v444, %v448
    %v467 = vunpack.c.l.b16 %v427
    %v468 = vunpack.c.l.b16 %v428
    %v469 = vunpack.c.l.b16 %v429
    %v470 = vunpack.c.l.b16 %v430
    %v471 = vunpack.c.l.b16 %v431
    %v472 = vunpack.c.l.b16 %v432
    %v473 = vunpack.c.l.b16 %v433
    %v474 = vunpack.c.l.b16 %v434
    %v475 = vunpack.c.l.b16 %v435
    %v476 = vunpack.c.l.b16 %v436
    %v477 = vunpack.c.l.b16 %v437
    %v478 = vunpack.c.l.b16 %v438
    %v479 = vunpack.c.l.b16 %v439
    %v480 = vunpack.c.l.b16 %v440
    %v481 = vunpack.c.l.b16 %v441
    %v482 = vunpack.c.l.b16 %v442
    %v483 = vpack.c.b16 %v468, %v467
    %v484 = vpack.c.b16 %v470, %v469
    %v485 = vpack.c.b16 %v472, %v471
    %v486 = vpack.c.b16 %v474, %v473
    %v487 = vpack.c.b16 %v476, %v475
    %v488 = vpack.c.b16 %v478, %v477
    %v489 = vpack.c.b16 %v480, %v479
    %v490 = vpack.c.b16 %v482, %v481
    %499 = vmatprep.subr.bf16.mxu0 0
    %500 = vmatpush1.bf16.msra.mxu0 %v483
    %501 = vmatprep.subr.bf16.mxu0 0
    %502 = vmatpush1.bf16.msra.mxu0 %v484
    %503 = vmatprep.subr.bf16.mxu0 0
    %504 = vmatpush1.bf16.msra.mxu0 %v485
    %505 = vmatprep.subr.bf16.mxu0 0
    %506 = vmatpush1.bf16.msra.mxu0 %v486
    %507 = vmatprep.subr.bf16.mxu0 0
    %508 = vmatpush1.bf16.msra.mxu0 %v487
    %509 = vmatprep.subr.bf16.mxu0 0
    %510 = vmatpush1.bf16.msra.mxu0 %v488
    %511 = vmatprep.subr.bf16.mxu0 0
    %512 = vmatpush1.bf16.msra.mxu0 %v489
    %513 = vmatprep.subr.bf16.mxu0 0
    %514 = vmatpush1.bf16.msra.mxu0 %v490
    %515 = vmatprep.subr.bf16.mxu0 0
    %516 = vmatpush1.bf16.msra.mxu0 0
    %517 = vmatprep.subr.bf16.mxu0 0
    %518 = vmatpush1.bf16.msra.mxu0 0
    %519 = vmatprep.subr.bf16.mxu0 0
    %520 = vmatpush1.bf16.msra.mxu0 0
    %521 = vmatprep.subr.bf16.mxu0 0
    %522 = vmatpush1.bf16.msra.mxu0 0
    %523 = vmatprep.subr.bf16.mxu0 0
    %524 = vmatpush1.bf16.msra.mxu0 0
    %525 = vmatprep.subr.bf16.mxu0 0
    %526 = vmatpush1.bf16.msra.mxu0 0
    %527 = vmatprep.subr.bf16.mxu0 0
    %528 = vmatpush1.bf16.msra.mxu0 0
    %529 = vmatprep.subr.bf16.mxu0 0
    %530 = vmatpush1.bf16.msra.mxu0 0
    %531 = vmatprep.mubr.bf16.mxu0 0
    %532 = vmatmul.mubr.bf16.gmra.mrb[0].mxu0 %v425
    %v533 = vpop.f32.mrb[0].mxu0
    %v534 = vadd.f32 %v449, %v533
    %v535 = vpop.f32.mrb[0].mxu0
    %v536 = vpop.f32.mrb[0].mxu0
    %v537 = vpop.f32.mrb[0].mxu0
    %538 = vdwg.mxu0
    %v539 = vmax.f32 %v534, 0.0
    %v540 = vpack.c.bf16 %v539, %v539
    %s541 = scalar_lea.vmem [#allocation7], 192
    %v542 = vld [vmem:[%s541] sm:$0xf]
    %v543 = vld [vmem:[%s541 + $0x4] sm:$0xf]
    %v544 = vld [vmem:[%s541 + $0x8] sm:$0xf]
    %v545 = vld [vmem:[%s541 + $0xc] sm:$0xf]
    %v546 = vld [vmem:[%s541 + $0x10] sm:$0xf]
    %v547 = vld [vmem:[%s541 + $0x14] sm:$0xf]
    %v548 = vld [vmem:[%s541 + $0x18] sm:$0xf]
    %v549 = vld [vmem:[%s541 + $0x1c] sm:$0xf]
    %v550 = vld [vmem:[%s541 + $0x20] sm:$0xf]
    %v551 = vld [vmem:[%s541 + $0x24] sm:$0xf]
    %v552 = vld [vmem:[%s541 + $0x28] sm:$0xf]
    %v553 = vld [vmem:[%s541 + $0x2c] sm:$0xf]
    %v554 = vld [vmem:[%s541 + $0x30] sm:$0xf]
    %v555 = vld [vmem:[%s541 + $0x34] sm:$0xf]
    %v556 = vld [vmem:[%s541 + $0x38] sm:$0xf]
    %v557 = vld [vmem:[%s541 + $0x3c] sm:$0xf]
    %s558 = scalar_lea.vmem %s4, 3
    %v559 = vld [vmem:[%s558] sm:$0x1]
    %v561 = vlaneseq
    %v562 = vshrl.u32 %v561, 7
    %v563 = vsub.s32 0, %v562
    %v564 = vrot.slane %v559, %v563
    %v582 = vunpack.c.l.b16 %v542
    %v583 = vunpack.c.l.b16 %v543
    %v584 = vunpack.c.l.b16 %v544
    %v585 = vunpack.c.l.b16 %v545
    %v586 = vunpack.c.l.b16 %v546
    %v587 = vunpack.c.l.b16 %v547
    %v588 = vunpack.c.l.b16 %v548
    %v589 = vunpack.c.l.b16 %v549
    %v590 = vunpack.c.l.b16 %v550
    %v591 = vunpack.c.l.b16 %v551
    %v592 = vunpack.c.l.b16 %v552
    %v593 = vunpack.c.l.b16 %v553
    %v594 = vunpack.c.l.b16 %v554
    %v595 = vunpack.c.l.b16 %v555
    %v596 = vunpack.c.l.b16 %v556
    %v597 = vunpack.c.l.b16 %v557
    %v598 = vpack.c.b16 %v583, %v582
    %v599 = vpack.c.b16 %v585, %v584
    %v600 = vpack.c.b16 %v587, %v586
    %v601 = vpack.c.b16 %v589, %v588
    %v602 = vpack.c.b16 %v591, %v590
    %v603 = vpack.c.b16 %v593, %v592
    %v604 = vpack.c.b16 %v595, %v594
    %v605 = vpack.c.b16 %v597, %v596
    %614 = vmatprep.subr.bf16.mxu0 0
    %615 = vmatpush1.bf16.msra.mxu0 %v598
    %616 = vmatprep.subr.bf16.mxu0 0
    %617 = vmatpush1.bf16.msra.mxu0 %v599
    %618 = vmatprep.subr.bf16.mxu0 0
    %619 = vmatpush1.bf16.msra.mxu0 %v600
    %620 = vmatprep.subr.bf16.mxu0 0
    %621 = vmatpush1.bf16.msra.mxu0 %v601
    %622 = vmatprep.subr.bf16.mxu0 0
    %623 = vmatpush1.bf16.msra.mxu0 %v602
    %624 = vmatprep.subr.bf16.mxu0 0
    %625 = vmatpush1.bf16.msra.mxu0 %v603
    %626 = vmatprep.subr.bf16.mxu0 0
    %627 = vmatpush1.bf16.msra.mxu0 %v604
    %628 = vmatprep.subr.bf16.mxu0 0
    %629 = vmatpush1.bf16.msra.mxu0 %v605
    %630 = vmatprep.subr.bf16.mxu0 0
    %631 = vmatpush1.bf16.msra.mxu0 0
    %632 = vmatprep.subr.bf16.mxu0 0
    %633 = vmatpush1.bf16.msra.mxu0 0
    %634 = vmatprep.subr.bf16.mxu0 0
    %635 = vmatpush1.bf16.msra.mxu0 0
    %636 = vmatprep.subr.bf16.mxu0 0
    %637 = vmatpush1.bf16.msra.mxu0 0
    %638 = vmatprep.subr.bf16.mxu0 0
    %639 = vmatpush1.bf16.msra.mxu0 0
    %640 = vmatprep.subr.bf16.mxu0 0
    %641 = vmatpush1.bf16.msra.mxu0 0
    %642 = vmatprep.subr.bf16.mxu0 0
    %643 = vmatpush1.bf16.msra.mxu0 0
    %644 = vmatprep.subr.bf16.mxu0 0
    %645 = vmatpush1.bf16.msra.mxu0 0
    %646 = vmatprep.mubr.bf16.mxu0 0
    %647 = vmatmul.mubr.bf16.gmra.mrb[0].mxu0 %v540
    %v648 = vpop.f32.mrb[0].mxu0
    %v649 = vadd.f32 %v564, %v648
    %v650 = vpop.f32.mrb[0].mxu0
    %v651 = vpop.f32.mrb[0].mxu0
    %v652 = vpop.f32.mrb[0].mxu0
    %653 = vdwg.mxu0
    %v654 = vmax.f32 %v649, 0.0
    %v655 = vpack.c.bf16 %v654, %v654
    %v656 = vld [vmem:[#allocation8] sm:$0xf]
    %v657 = vld [vmem:[#allocation8 + $0x4] sm:$0xf]
    %v658 = vld [vmem:[#allocation8 + $0x8] sm:$0xf]
    %v659 = vld [vmem:[#allocation8 + $0xc] sm:$0xf]
    %v660 = vld [vmem:[#allocation8 + $0x10] sm:$0xf]
    %v661 = vld [vmem:[#allocation8 + $0x14] sm:$0xf]
    %v662 = vld [vmem:[#allocation8 + $0x18] sm:$0xf]
    %v663 = vld [vmem:[#allocation8 + $0x1c] sm:$0xf]
    %v664 = vld [vmem:[#allocation8 + $0x20] sm:$0xf]
    %v665 = vld [vmem:[#allocation8 + $0x24] sm:$0xf]
    %v666 = vld [vmem:[#allocation8 + $0x28] sm:$0xf]
    %v667 = vld [vmem:[#allocation8 + $0x2c] sm:$0xf]
    %v668 = vld [vmem:[#allocation8 + $0x30] sm:$0xf]
    %v669 = vld [vmem:[#allocation8 + $0x34] sm:$0xf]
    %v670 = vld [vmem:[#allocation8 + $0x38] sm:$0xf]
    %v671 = vld [vmem:[#allocation8 + $0x3c] sm:$0xf]
    %v672 = vld [vmem:[%s6] sm:$0x1]
    %v674 = vlaneseq
    %v675 = vshrl.u32 %v674, 7
    %v676 = vsub.s32 0, %v675
    %v677 = vrot.slane %v672, %v676
    %v695 = vunpack.c.l.b16 %v656
    %v696 = vunpack.c.l.b16 %v657
    %v697 = vunpack.c.l.b16 %v658
    %v698 = vunpack.c.l.b16 %v659
    %v699 = vunpack.c.l.b16 %v660
    %v700 = vunpack.c.l.b16 %v661
    %v701 = vunpack.c.l.b16 %v662
    %v702 = vunpack.c.l.b16 %v663
    %v703 = vunpack.c.l.b16 %v664
    %v704 = vunpack.c.l.b16 %v665
    %v705 = vunpack.c.l.b16 %v666
    %v706 = vunpack.c.l.b16 %v667
    %v707 = vunpack.c.l.b16 %v668
    %v708 = vunpack.c.l.b16 %v669
    %v709 = vunpack.c.l.b16 %v670
    %v710 = vunpack.c.l.b16 %v671
    %v711 = vpack.c.b16 %v696, %v695
    %v712 = vpack.c.b16 %v698, %v697
    %v713 = vpack.c.b16 %v700, %v699
    %v714 = vpack.c.b16 %v702, %v701
    %v715 = vpack.c.b16 %v704, %v703
    %v716 = vpack.c.b16 %v706, %v705
    %v717 = vpack.c.b16 %v708, %v707
    %v718 = vpack.c.b16 %v710, %v709
    %727 = vmatprep.subr.bf16.mxu0 0
    %728 = vmatpush1.bf16.msra.mxu0 %v711
    %729 = vmatprep.subr.bf16.mxu0 0
    %730 = vmatpush1.bf16.msra.mxu0 %v712
    %731 = vmatprep.subr.bf16.mxu0 0
    %732 = vmatpush1.bf16.msra.mxu0 %v713
    %733 = vmatprep.subr.bf16.mxu0 0
    %734 = vmatpush1.bf16.msra.mxu0 %v714
    %735 = vmatprep.subr.bf16.mxu0 0
    %736 = vmatpush1.bf16.msra.mxu0 %v715
    %737 = vmatprep.subr.bf16.mxu0 0
    %738 = vmatpush1.bf16.msra.mxu0 %v716
    %739 = vmatprep.subr.bf16.mxu0 0
    %740 = vmatpush1.bf16.msra.mxu0 %v717
    %741 = vmatprep.subr.bf16.mxu0 0
    %742 = vmatpush1.bf16.msra.mxu0 %v718
    %743 = vmatprep.subr.bf16.mxu0 0
    %744 = vmatpush1.bf16.msra.mxu0 0
    %745 = vmatprep.subr.bf16.mxu0 0
    %746 = vmatpush1.bf16.msra.mxu0 0
    %747 = vmatprep.subr.bf16.mxu0 0
    %748 = vmatpush1.bf16.msra.mxu0 0
    %749 = vmatprep.subr.bf16.mxu0 0
    %750 = vmatpush1.bf16.msra.mxu0 0
    %751 = vmatprep.subr.bf16.mxu0 0
    %752 = vmatpush1.bf16.msra.mxu0 0
    %753 = vmatprep.subr.bf16.mxu0 0
    %754 = vmatpush1.bf16.msra.mxu0 0
    %755 = vmatprep.subr.bf16.mxu0 0
    %756 = vmatpush1.bf16.msra.mxu0 0
    %757 = vmatprep.subr.bf16.mxu0 0
    %758 = vmatpush1.bf16.msra.mxu0 0
    %759 = vmatprep.mubr.bf16.mxu0 0
    %760 = vmatmul.mubr.bf16.gmra.mrb[0].mxu0 %v655
    %v761 = vpop.f32.mrb[0].mxu0
    %v762 = vadd.f32 %v677, %v761
    %v763 = vpop.f32.mrb[0].mxu0
    %v764 = vpop.f32.mrb[0].mxu0
    %v765 = vpop.f32.mrb[0].mxu0
    %766 = vdwg.mxu0
    %vm767 = vcmask 64512
    %768 = vst.msk [vmem:[#allocation10] sm:$0xff] %vm767, %v762
    %v769 = vlaneseq
    %v770 = vand.u32 %v769, 127
    %vm771 = vcmp.lt.s32.totalorder %v770, 8
    %v772 = vsel %vm771, %v762, -inf
    %773 = vmax.xlane.f32.xlu0 %v772
    %v774 = vpop.xlane.xlu0 %773
    %vm775 = vcmp.ge.f32.partialorder %v772, %v774
    %v776 = vcvt.s32.f32 %v770
    %v777 = vsel %vm775, %v776, 128.0
    %778 = vmin.xlane.f32.xlu0 %v777
    %v779 = vpop.xlane.xlu0 %778
    %v780 = vcvt.f32.s32.to.zero.pseudo %v779
    %vm781 = vcmask 7168
    %782 = vst.msk [vmem:[%s8] sm:$0xff] %vm781, %v780
    // Predicated region
    $region46: #{tpu_custom_call.1} parent=1 // pred_check
      _
    $region47: #{tpu_custom_call.1} parent=1 // pred_check_branch
      %784 = sbr.rel (0) target = $region49
    $region48: #{tpu_custom_call.1} parent=1 // pred_region
      %s786 = ssub.s32 128, 128
      %787 = vsyncadd [#allocation4], %s786
      %s789 = sshll.u32 [#allocation10], 4
      %s790 = int_to_ptr.vmem [resolvable:$true] %s789
      %792 = dma.vmem_to_hbm [thread:$0]  %s790, 128, %s7, [#allocation4]
    $region49: #{tpu_custom_call.1} parent=1 // pred_fallthru
      _
    // Predicated region
    $region50: #{tpu_custom_call.1} parent=1 // pred_check
      _
    $region51: #{tpu_custom_call.1} parent=1 // pred_check_branch
      %794 = sbr.rel (0) target = $region53
    $region52: #{tpu_custom_call.1} parent=1 // pred_region
      _
    $region53: #{tpu_custom_call.1} parent=1 // pred_fallthru
      _
    // Predicated region
    $region54: #{tpu_custom_call.1} parent=1 // pred_check
      _
    $region55: #{tpu_custom_call.1} parent=1 // pred_check_branch
      %796 = sbr.rel (0) target = $region57
    $region56: #{tpu_custom_call.1} parent=1 // pred_region
      %797 = dma.done [#allocation4], 128
    $region57: #{tpu_custom_call.1} parent=1 // pred_fallthru
      _
    // Predicated region
    $region58: #{tpu_custom_call.1} parent=1 // pred_check
      _
    $region59: #{tpu_custom_call.1} parent=1 // pred_check_branch
      %799 = sbr.rel (0) target = $region61
    $region60: #{tpu_custom_call.1} parent=1 // pred_region
      _
    $region61: #{tpu_custom_call.1} parent=1 // pred_fallthru
      _
    %800 = vsyncpa [#allocation3], 1
    %801 = vsyncpa [#allocation6], 1
    %802 = vsyncpa [#allocation9], 1
    %803 = vsyncpa [#allocation4], 1

</llo_original>
